<compile_context>
chip_gen: v5e
topology: v5e:2x2
jax: 0.10.0
libtpu: 0.0.40
codegen_flags: <defaults>
</compile_context>

<pallas_src>
import functools

import jax
import jax.numpy as jnp
from jax.experimental import pallas as pl
from jax.experimental.pallas import tpu as pltpu


def _round_up(x, m):
    return (x + m - 1) // m * m


def _pick_tile(n_p, cap):
    """Largest multiple of 128 that divides n_p and is <= cap."""
    best = 128
    d = 128
    while d <= min(cap, n_p):
        if n_p % d == 0:
            best = d
        d += 128
    return best


# ---------------------------------------------------------------------------
# Fused kernel: out = relu(A_hat @ (X @ W) + bias)
#   grid = (row tiles, K tiles); output block resident across K (accumulator).
# ---------------------------------------------------------------------------
def gcn_fused_kernel(a_ref, x_ref, w_ref, b_ref, o_ref):
    k = pl.program_id(1)

    @pl.when(k == 0)
    def _():
        o_ref[...] = jnp.zeros_like(o_ref)

    # h_k = x_k @ W  (bf16 x bf16 -> f32 on MXU, cast back to bf16 for A-dot)
    h = jnp.dot(
        x_ref[...], w_ref[...], preferred_element_type=jnp.float32
    ).astype(jnp.bfloat16)

    # accumulate A_hat[i, k] @ h_k directly into the resident f32 output block
    o_ref[...] += jnp.dot(a_ref[...], h, preferred_element_type=jnp.float32)

    @pl.when(k == pl.num_programs(1) - 1)
    def _():
        o_ref[...] = jnp.maximum(o_ref[...] + b_ref[...], 0.0)


# ---------------------------------------------------------------------------
# Wrapper
# ---------------------------------------------------------------------------
@functools.partial(jax.jit, static_argnames=("max_tm", "max_tk"))
def semi_gcn_conv_pallas(a_hat, x, weight_t, bias, *, max_tm=512, max_tk=1024):
    """relu(A_hat @ (x @ weight_t) + bias) as one fused Pallas TPU kernel.

    a_hat:    [N, N]        dense normalized adjacency (bf16 or f32)
    x:        [N, C_in]     node features (f32)
    weight_t: [C_in, C_out] pre-transposed GCN weight (f32)
    bias:     [C_out]       (f32)
    """
    n, c_in = x.shape
    c_out = weight_t.shape[1]

    # Lane-dense padding (multiples of 128); N padded minimally to 128.
    c_in_p = _round_up(c_in, 128)
    c_out_p = _round_up(c_out, 128)
    n_p = _round_up(n, 128)

    # Row tile: keep >= 2 iterations on the 'parallel' axis when possible
    # (v7x has 2 TensorCores sharded over it).  K tile: larger to cut per-step
    # overhead; both must divide the (minimally) padded N.
    cap_tm = max_tm
    if n_p >= 256:
        cap_tm = min(cap_tm, n_p // 2)
    tm = _pick_tile(n_p, cap_tm)
    tk = _pick_tile(n_p, max_tk)

    # bf16 operands for the bandwidth-bound aggregation (no-op if already bf16).
    a_b = a_hat.astype(jnp.bfloat16)
    x_b = x.astype(jnp.bfloat16)
    w_b = weight_t.astype(jnp.bfloat16)

    # Zero-pad only when needed (zeros contribute nothing to the matmuls).
    a_p = a_b if n == n_p else (
        jnp.zeros((n_p, n_p), jnp.bfloat16).at[:n, :n].set(a_b)
    )
    x_p = x_b if (n, c_in) == (n_p, c_in_p) else (
        jnp.zeros((n_p, c_in_p), jnp.bfloat16).at[:n, :c_in].set(x_b)
    )
    w_p = w_b if (c_in, c_out) == (c_in_p, c_out_p) else (
        jnp.zeros((c_in_p, c_out_p), jnp.bfloat16).at[:c_in, :c_out].set(w_b)
    )
    b_p = jnp.zeros((1, c_out_p), jnp.float32).at[0, :c_out].set(bias)

    grid = (n_p // tm, n_p // tk)

    flops = 2 * n_p * n_p * c_out_p + 2 * grid[0] * n_p * c_in_p * c_out_p
    bytes_accessed = (
        a_p.size * 2                 # bf16 A_hat, read once
        + grid[0] * x_p.size * 2     # bf16 X, re-read once per row tile
        + w_p.size * 2               # bf16 W, VMEM resident
        + b_p.size * 4
        + n_p * c_out_p * 4          # f32 output writeback
    )

    out_p = pl.pallas_call(
        gcn_fused_kernel,
        out_shape=jax.ShapeDtypeStruct((n_p, c_out_p), jnp.float32),
        grid=grid,
        in_specs=[
            pl.BlockSpec((tm, tk), lambda i, k: (i, k)),           # A_hat tile
            pl.BlockSpec((tk, c_in_p), lambda i, k: (k, 0)),       # X (K slice)
            pl.BlockSpec((c_in_p, c_out_p), lambda i, k: (0, 0)),  # W resident
            pl.BlockSpec((1, c_out_p), lambda i, k: (0, 0)),       # bias
        ],
        out_specs=pl.BlockSpec((tm, c_out_p), lambda i, k: (i, 0)),
        compiler_params=pltpu.CompilerParams(
            dimension_semantics=("parallel", "arbitrary"),
            vmem_limit_bytes=48 * 1024 * 1024,   # fits v7x's 64 MiB with headroom
        ),
        cost_estimate=pl.CostEstimate(
            flops=flops, transcendentals=0, bytes_accessed=bytes_accessed
        ),
    )(a_p, x_p, w_p, b_p)

    return out_p[:n, :c_out]


# ---------------------------------------------------------------------------
# Glue: dense D^{-1/2}(A + I)D^{-1/2} matching PyG gcn_norm
# (add_remaining_self_loops: keep existing self-loop weights, add weight-1
# loops only for nodes lacking one).  Built directly in bf16 — no extra
# cast pass over the N^2 adjacency before the kernel.
# ---------------------------------------------------------------------------
def gcn_norm_dense(edge_index, num_nodes, dtype=jnp.bfloat16):
    """edge_index: [2, E] int32 (row 0 = source, row 1 = target).

    Returned A_hat[t, s] multiplies features of source node s into target t.
    """
    src, dst = edge_index[0], edge_index[1]
    a = jnp.zeros((num_nodes, num_nodes), jnp.float32).at[dst, src].add(1.0)
    idx = jnp.arange(num_nodes)
    diag = jnp.diagonal(a)
    a = a.at[idx, idx].set(jnp.where(diag > 0, diag, 1.0))  # remaining self-loops
    deg = jnp.sum(a, axis=1)
    dinv = jnp.where(deg > 0, jax.lax.rsqrt(deg), 0.0)
    a_hat = dinv[:, None] * a * dinv[None, :]
    return a_hat.astype(dtype)


def reference(a_hat_f32, x, weight_t, bias):
    return jnp.maximum(a_hat_f32 @ (x @ weight_t) + bias.reshape(1, -1), 0.0)


if __name__ == "__main__":
    key = jax.random.PRNGKey(0)
    N, C_IN, C_OUT, E = 16, 8, 32, 48

    k_x, k_w, k_b, k_src, k_off = jax.random.split(key, 5)

    # node features [N, C_in]
    x = jax.random.normal(k_x, (N, C_IN), jnp.float32)

    # edge_index [2, E] with no self loops (dst = src + random nonzero offset)
    src = jax.random.randint(k_src, (E,), 0, N, jnp.int32)
    off = jax.random.randint(k_off, (E,), 1, N, jnp.int32)
    dst = (src + off) % N
    edge_index = jnp.stack([src, dst], axis=0)

    # GCNConv parameters: weight [C_out, C_in] (glorot-style), bias [C_out]
    weight = jax.random.uniform(
        k_w, (C_OUT, C_IN), jnp.float32, -1.0, 1.0
    ) * jnp.sqrt(6.0 / (C_IN + C_OUT))
    bias = jax.random.uniform(k_b, (C_OUT,), jnp.float32, -0.1, 0.1)

    weight_t = weight.T                       # [C_in, C_out]
    a_hat = gcn_norm_dense(edge_index, N)     # [N, N] bf16 (single build pass)

    out = semi_gcn_conv_pallas(a_hat, x, weight_t, bias)
    out = jax.block_until_ready(out)

    ref = reference(a_hat.astype(jnp.float32), x, weight_t, bias)
    assert out.shape == (N, C_OUT)
    # bf16 A_hat / X / W loosen the tolerance vs the full-f32 reference.
    assert jnp.allclose(out, ref, atol=2e-2, rtol=2e-2), (
        float(jnp.max(jnp.abs(out - ref)))
    )

    print("KERNEL_OK")
</pallas_src>

<mosaic_0001>
module attributes {stable_mosaic.version = 11 : i64} {
  func.func @gcn_fused_kernel(%arg0: i32, %arg1: i32, %arg2: memref<128x128xbf16, #tpu.memory_space<vmem>>, %arg3: memref<128x128xbf16, #tpu.memory_space<vmem>>, %arg4: memref<128x128xbf16, #tpu.memory_space<vmem>>, %arg5: memref<1x128xf32, #tpu.memory_space<vmem>>, %arg6: memref<128x128xf32, #tpu.memory_space<vmem>>) attributes {dimension_semantics = [#tpu.dimension_semantics<parallel>, #tpu.dimension_semantics<arbitrary>], iteration_bounds = array<i64: 1, 1>, scalar_prefetch = 0 : i64, scratch_operands = 0 : i64, tpu.core_type = #tpu.core_type<tc>, window_params = [{transform_indices = @transform_0, window_bounds = array<i64: 128, 128>}, {transform_indices = @transform_1, window_bounds = array<i64: 128, 128>}, {pipeline_mode = #tpu.pipeline_mode<synchronous>, transform_indices = @transform_2, window_bounds = array<i64: 128, 128>}, {pipeline_mode = #tpu.pipeline_mode<synchronous>, transform_indices = @transform_3, window_bounds = array<i64: 1, 128>}, {transform_indices = @transform_4, window_bounds = array<i64: 128, 128>}]} {
    %c0_i32 = arith.constant 0 : i32
    %0 = arith.cmpi eq, %arg1, %c0_i32 : i32
    %1 = arith.extui %0 : i1 to i32
    %c0_i32_0 = arith.constant 0 : i32
    %2 = arith.cmpi ne, %1, %c0_i32_0 : i32
    scf.if %2 {
      %cst_13 = arith.constant 0.000000e+00 : f32
      %15 = vector.broadcast %cst_13 : f32 to vector<128x128xf32>
      %c0_14 = arith.constant 0 : index
      %c0_15 = arith.constant 0 : index
      %16 = vector.load %arg6[%c0_14, %c0_15] : memref<128x128xf32, #tpu.memory_space<vmem>>, vector<128x128xf32>
      tpu.vector_store %arg6[%c0_14, %c0_15], %15 {strides = array<i32>} : memref<128x128xf32, #tpu.memory_space<vmem>>, vector<128x128xf32>,
    } else {
    }
    %c0 = arith.constant 0 : index
    %c0_1 = arith.constant 0 : index
    %3 = vector.load %arg3[%c0, %c0_1] : memref<128x128xbf16, #tpu.memory_space<vmem>>, vector<128x128xbf16>
    %c0_2 = arith.constant 0 : index
    %c0_3 = arith.constant 0 : index
    %4 = vector.load %arg4[%c0_2, %c0_3] : memref<128x128xbf16, #tpu.memory_space<vmem>>, vector<128x128xbf16>
    %cst = arith.constant dense<0.000000e+00> : vector<128x128xf32>
    %5 = tpu.matmul %3, %4, %cst {dimension_numbers = #tpu.dot_dimension_numbers<[1], [0], [0], [1], [0, 0, 1, 1], [], []>} : vector<128x128xbf16>, vector<128x128xbf16>, vector<128x128xf32> -> vector<128x128xf32>
    %6 = arith.truncf %5 : vector<128x128xf32> to vector<128x128xbf16>
    %c0_4 = arith.constant 0 : index
    %c0_5 = arith.constant 0 : index
    %7 = vector.load %arg6[%c0_4, %c0_5] : memref<128x128xf32, #tpu.memory_space<vmem>>, vector<128x128xf32>
    %c0_6 = arith.constant 0 : index
    %c0_7 = arith.constant 0 : index
    %8 = vector.load %arg2[%c0_6, %c0_7] : memref<128x128xbf16, #tpu.memory_space<vmem>>, vector<128x128xbf16>
    %cst_8 = arith.constant dense<0.000000e+00> : vector<128x128xf32>
    %9 = tpu.matmul %8, %6, %cst_8 {dimension_numbers = #tpu.dot_dimension_numbers<[1], [0], [0], [1], [0, 0, 1, 1], [], []>} : vector<128x128xbf16>, vector<128x128xbf16>, vector<128x128xf32> -> vector<128x128xf32>
    %10 = arith.addf %7, %9 : vector<128x128xf32>
    %c0_9 = arith.constant 0 : index
    %c0_10 = arith.constant 0 : index
    %11 = vector.load %arg6[%c0_9, %c0_10] : memref<128x128xf32, #tpu.memory_space<vmem>>, vector<128x128xf32>
    tpu.vector_store %arg6[%c0_9, %c0_10], %10 {strides = array<i32>} : memref<128x128xf32, #tpu.memory_space<vmem>>, vector<128x128xf32>,
    %c0_i32_11 = arith.constant 0 : i32
    %12 = arith.cmpi eq, %arg1, %c0_i32_11 : i32
    %13 = arith.extui %12 : i1 to i32
    %c0_i32_12 = arith.constant 0 : i32
    %14 = arith.cmpi ne, %13, %c0_i32_12 : i32
    scf.if %14 {
      %c0_13 = arith.constant 0 : index
      %c0_14 = arith.constant 0 : index
      %15 = vector.load %arg6[%c0_13, %c0_14] : memref<128x128xf32, #tpu.memory_space<vmem>>, vector<128x128xf32>
      %c0_15 = arith.constant 0 : index
      %c0_16 = arith.constant 0 : index
      %16 = vector.load %arg5[%c0_15, %c0_16] : memref<1x128xf32, #tpu.memory_space<vmem>>, vector<1x128xf32>
      %17 = vector.broadcast %16 : vector<1x128xf32> to vector<128x128xf32>
      %18 = arith.addf %15, %17 : vector<128x128xf32>
      %cst_17 = arith.constant 0.000000e+00 : f32
      %19 = vector.broadcast %cst_17 : f32 to vector<128x128xf32>
      %20 = arith.maximumf %18, %19 : vector<128x128xf32>
      %c0_18 = arith.constant 0 : index
      %c0_19 = arith.constant 0 : index
      %21 = vector.load %arg6[%c0_18, %c0_19] : memref<128x128xf32, #tpu.memory_space<vmem>>, vector<128x128xf32>
      tpu.vector_store %arg6[%c0_18, %c0_19], %20 {strides = array<i32>} : memref<128x128xf32, #tpu.memory_space<vmem>>, vector<128x128xf32>,
    } else {
    }
    return
  }
  func.func @transform_0(%arg0: i32, %arg1: i32) -> (i32, i32) {
    %c0_i32 = arith.constant 0 : i32
    return %arg0, %arg1 : i32, i32
  }
  func.func @transform_1(%arg0: i32, %arg1: i32) -> (i32, i32) {
    %c0_i32 = arith.constant 0 : i32
    %c0_i32_0 = arith.constant 0 : i32
    return %arg1, %c0_i32 : i32, i32
  }
  func.func @transform_2(%arg0: i32, %arg1: i32) -> (i32, i32) {
    %c0_i32 = arith.constant 0 : i32
    %c0_i32_0 = arith.constant 0 : i32
    %c0_i32_1 = arith.constant 0 : i32
    return %c0_i32, %c0_i32_0 : i32, i32
  }
  func.func @transform_3(%arg0: i32, %arg1: i32) -> (i32, i32) {
    %c0_i32 = arith.constant 0 : i32
    %c0_i32_0 = arith.constant 0 : i32
    %c0_i32_1 = arith.constant 0 : i32
    return %c0_i32, %c0_i32_0 : i32, i32
  }
  func.func @transform_4(%arg0: i32, %arg1: i32) -> (i32, i32) {
    %c0_i32 = arith.constant 0 : i32
    %c0_i32_0 = arith.constant 0 : i32
    return %arg0, %c0_i32 : i32, i32
  }
}

</mosaic_0001>

<llo_original>
// kernel: semi_gcn_conv_pallas.1
$region0: #{semi_gcn_conv_pallas.1}
  #allocation0 [shape = 'u32[]', space=smem, size = 0x4, offset = 0x4, fixed_abs, tag = 'smem constant byte address 0x4 - core index']
  #allocation1 [shape = 'u32[72,128]{1,0:T(1,128)}', space=vmem, size = 0x9000, scoped, tag = 'internal scratch']
  %s0 = inlined_call_operand.vmem [shape: bf16[128,128], index: 0, kind: input, shape index: {}]
  %s1 = inlined_call_operand.vmem [shape: bf16[128,128], index: 1, kind: input, shape index: {}]
  %s2 = inlined_call_operand.vmem [shape: bf16[128,128], index: 2, kind: input, shape index: {}]
  %s3 = inlined_call_operand.vmem [shape: f32[1,128], index: 3, kind: input, shape index: {}]
  %s4 = inlined_call_operand.vmem [shape: f32[128,128], index: 4, kind: output, shape index: {}]
  %s5 = sld [smem:[#allocation0]]
  $region34: #{semi_gcn_conv_pallas.1} parent=0
    _
  %s7 = ssub.s32 1, %s5
  %s8 = scalar_select 0, %s7, %s5
  // Predicated region
  $region2: #{semi_gcn_conv_pallas.1} parent=0 // pred_check
    _
  $region3: #{semi_gcn_conv_pallas.1} parent=0 // pred_check_branch
    %10 = sbr.rel (0) target = $region5
  $region4: #{semi_gcn_conv_pallas.1} parent=0 // pred_region
    _
  $region5: #{semi_gcn_conv_pallas.1} parent=0 // pred_fallthru
    _
  // Predicated region
  $region6: #{semi_gcn_conv_pallas.1} parent=0 // pred_check
    _
  $region7: #{semi_gcn_conv_pallas.1} parent=0 // pred_check_branch
    %12 = sbr.rel (0) target = $region9
  $region8: #{semi_gcn_conv_pallas.1} parent=0 // pred_region
    _
  $region9: #{semi_gcn_conv_pallas.1} parent=0 // pred_fallthru
    _
  // Predicated region
  $region10: #{semi_gcn_conv_pallas.1} parent=0 // pred_check
    _
  $region11: #{semi_gcn_conv_pallas.1} parent=0 // pred_check_branch
    %14 = sbr.rel (0) target = $region13
  $region12: #{semi_gcn_conv_pallas.1} parent=0 // pred_region
    _
  $region13: #{semi_gcn_conv_pallas.1} parent=0 // pred_fallthru
    _
  // Predicated region
  $region14: #{semi_gcn_conv_pallas.1} parent=0 // pred_check
    _
  $region15: #{semi_gcn_conv_pallas.1} parent=0 // pred_check_branch
    %16 = sbr.rel (0) target = $region17
  $region16: #{semi_gcn_conv_pallas.1} parent=0 // pred_region
    _
  $region17: #{semi_gcn_conv_pallas.1} parent=0 // pred_fallthru
    _
  %p17 = scmp.eq.s32.totalorder 0, 0
  // Predicated region
  $region18: #{semi_gcn_conv_pallas.1} parent=0 // pred_check
    %p18 = pneg %p17
  $region19: #{semi_gcn_conv_pallas.1} parent=0 // pred_check_branch
    %20 = sbr.rel (%p18) target = $region21
  $region20: #{semi_gcn_conv_pallas.1} parent=0 // pred_region
    %21 = vst [vmem:[%s4] sm:$0xff] 0.0
    %22 = vst [vmem:[%s4 + $0x8] sm:$0xff] 0.0
    %23 = vst [vmem:[%s4 + $0x10] sm:$0xff] 0.0
    %24 = vst [vmem:[%s4 + $0x18] sm:$0xff] 0.0
    %25 = vst [vmem:[%s4 + $0x20] sm:$0xff] 0.0
    %26 = vst [vmem:[%s4 + $0x28] sm:$0xff] 0.0
    %27 = vst [vmem:[%s4 + $0x30] sm:$0xff] 0.0
    %28 = vst [vmem:[%s4 + $0x38] sm:$0xff] 0.0
    %29 = vst [vmem:[%s4 + $0x40] sm:$0xff] 0.0
    %30 = vst [vmem:[%s4 + $0x48] sm:$0xff] 0.0
    %31 = vst [vmem:[%s4 + $0x50] sm:$0xff] 0.0
    %32 = vst [vmem:[%s4 + $0x58] sm:$0xff] 0.0
    %33 = vst [vmem:[%s4 + $0x60] sm:$0xff] 0.0
    %34 = vst [vmem:[%s4 + $0x68] sm:$0xff] 0.0
    %35 = vst [vmem:[%s4 + $0x70] sm:$0xff] 0.0
    %36 = vst [vmem:[%s4 + $0x78] sm:$0xff] 0.0
  $region21: #{semi_gcn_conv_pallas.1} parent=0 // pred_fallthru
    _
  %v37 = vld [vmem:[%s1] sm:$0xf]
  %v38 = vld [vmem:[%s1 + $0x4] sm:$0xf]
  %v39 = vld [vmem:[%s1 + $0x8] sm:$0xf]
  %v40 = vld [vmem:[%s1 + $0xc] sm:$0xf]
  %v41 = vld [vmem:[%s1 + $0x10] sm:$0xf]
  %v42 = vld [vmem:[%s1 + $0x14] sm:$0xf]
  %v43 = vld [vmem:[%s1 + $0x18] sm:$0xf]
  %v44 = vld [vmem:[%s1 + $0x1c] sm:$0xf]
  %v45 = vld [vmem:[%s1 + $0x20] sm:$0xf]
  %v46 = vld [vmem:[%s1 + $0x24] sm:$0xf]
  %v47 = vld [vmem:[%s1 + $0x28] sm:$0xf]
  %v48 = vld [vmem:[%s1 + $0x2c] sm:$0xf]
  %v49 = vld [vmem:[%s1 + $0x30] sm:$0xf]
  %v50 = vld [vmem:[%s1 + $0x34] sm:$0xf]
  %v51 = vld [vmem:[%s1 + $0x38] sm:$0xf]
  %v52 = vld [vmem:[%s1 + $0x3c] sm:$0xf]
  %v53 = vld [vmem:[%s2] sm:$0xf]
  %v54 = vld [vmem:[%s2 + $0x4] sm:$0xf]
  %v55 = vld [vmem:[%s2 + $0x8] sm:$0xf]
  %v56 = vld [vmem:[%s2 + $0xc] sm:$0xf]
  %v57 = vld [vmem:[%s2 + $0x10] sm:$0xf]
  %v58 = vld [vmem:[%s2 + $0x14] sm:$0xf]
  %v59 = vld [vmem:[%s2 + $0x18] sm:$0xf]
  %v60 = vld [vmem:[%s2 + $0x1c] sm:$0xf]
  %v61 = vld [vmem:[%s2 + $0x20] sm:$0xf]
  %v62 = vld [vmem:[%s2 + $0x24] sm:$0xf]
  %v63 = vld [vmem:[%s2 + $0x28] sm:$0xf]
  %v64 = vld [vmem:[%s2 + $0x2c] sm:$0xf]
  %v65 = vld [vmem:[%s2 + $0x30] sm:$0xf]
  %v66 = vld [vmem:[%s2 + $0x34] sm:$0xf]
  %v67 = vld [vmem:[%s2 + $0x38] sm:$0xf]
  %v68 = vld [vmem:[%s2 + $0x3c] sm:$0xf]
  %v85 = vunpack.c.l.b16 %v37
  %v86 = vunpack.c.l.b16 %v38
  %v87 = vunpack.c.l.b16 %v39
  %v88 = vunpack.c.l.b16 %v40
  %v89 = vunpack.c.l.b16 %v41
  %v90 = vunpack.c.l.b16 %v42
  %v91 = vunpack.c.l.b16 %v43
  %v92 = vunpack.c.l.b16 %v44
  %v93 = vunpack.c.l.b16 %v45
  %v94 = vunpack.c.l.b16 %v46
  %v95 = vunpack.c.l.b16 %v47
  %v96 = vunpack.c.l.b16 %v48
  %v97 = vunpack.c.l.b16 %v49
  %v98 = vunpack.c.l.b16 %v50
  %v99 = vunpack.c.l.b16 %v51
  %v100 = vunpack.c.l.b16 %v52
  %v101 = vpack.c.b16 %v86, %v85
  %v102 = vpack.c.b16 %v88, %v87
  %v103 = vpack.c.b16 %v90, %v89
  %v104 = vpack.c.b16 %v92, %v91
  %v105 = vpack.c.b16 %v94, %v93
  %v106 = vpack.c.b16 %v96, %v95
  %v107 = vpack.c.b16 %v98, %v97
  %v108 = vpack.c.b16 %v100, %v99
  %v133 = vunpack.c.l.b16 %v53
  %v134 = vunpack.c.l.b16 %v54
  %v135 = vunpack.c.l.b16 %v55
  %v136 = vunpack.c.l.b16 %v56
  %v137 = vunpack.c.l.b16 %v57
  %v138 = vunpack.c.l.b16 %v58
  %v139 = vunpack.c.l.b16 %v59
  %v140 = vunpack.c.l.b16 %v60
  %v141 = vunpack.c.l.b16 %v61
  %v142 = vunpack.c.l.b16 %v62
  %v143 = vunpack.c.l.b16 %v63
  %v144 = vunpack.c.l.b16 %v64
  %v145 = vunpack.c.l.b16 %v65
  %v146 = vunpack.c.l.b16 %v66
  %v147 = vunpack.c.l.b16 %v67
  %v148 = vunpack.c.l.b16 %v68
  %v149 = vpack.c.b16 %v134, %v133
  %v150 = vpack.c.b16 %v136, %v135
  %v151 = vpack.c.b16 %v138, %v137
  %v152 = vpack.c.b16 %v140, %v139
  %v153 = vpack.c.b16 %v142, %v141
  %v154 = vpack.c.b16 %v144, %v143
  %v155 = vpack.c.b16 %v146, %v145
  %v156 = vpack.c.b16 %v148, %v147
  %165 = vmatpush.bf16.msra.mxu0 %v156
  %166 = vmatpush.bf16.msra.mxu0 %v155
  %167 = vmatpush.bf16.msra.mxu0 %v154
  %168 = vmatpush.bf16.msra.mxu0 %v153
  %169 = vmatpush.bf16.msra.mxu0 %v152
  %170 = vmatpush.bf16.msra.mxu0 %v151
  %171 = vmatpush.bf16.msra.mxu0 %v150
  %172 = vmatpush.bf16.msra.mxu0 %v149
  %173 = vmatmul.bf16.gmra.mxu0 %v101
  %v174 = vpop.f32.mrf.mxu0
  %v175 = vadd.f32 0.0, %v174
  %v176 = vpop.f32.mrf.mxu0
  %v177 = vadd.f32 0.0, %v176
  %178 = vmatmul.bf16.gmra.mxu0 %v102
  %v179 = vpop.f32.mrf.mxu0
  %v180 = vadd.f32 0.0, %v179
  %v181 = vpop.f32.mrf.mxu0
  %v182 = vadd.f32 0.0, %v181
  %183 = vmatmul.bf16.gmra.mxu0 %v103
  %v184 = vpop.f32.mrf.mxu0
  %v185 = vadd.f32 0.0, %v184
  %v186 = vpop.f32.mrf.mxu0
  %v187 = vadd.f32 0.0, %v186
  %188 = vmatmul.bf16.gmra.mxu0 %v104
  %v189 = vpop.f32.mrf.mxu0
  %v190 = vadd.f32 0.0, %v189
  %v191 = vpop.f32.mrf.mxu0
  %v192 = vadd.f32 0.0, %v191
  %193 = vmatmul.bf16.gmra.mxu0 %v105
  %v194 = vpop.f32.mrf.mxu0
  %v195 = vadd.f32 0.0, %v194
  %v196 = vpop.f32.mrf.mxu0
  %v197 = vadd.f32 0.0, %v196
  %198 = vmatmul.bf16.gmra.mxu0 %v106
  %v199 = vpop.f32.mrf.mxu0
  %v200 = vadd.f32 0.0, %v199
  %v201 = vpop.f32.mrf.mxu0
  %v202 = vadd.f32 0.0, %v201
  %203 = vmatmul.bf16.gmra.mxu0 %v107
  %v204 = vpop.f32.mrf.mxu0
  %v205 = vadd.f32 0.0, %v204
  %v206 = vpop.f32.mrf.mxu0
  %v207 = vadd.f32 0.0, %v206
  %208 = vmatmul.bf16.gmra.mxu0 %v108
  %v209 = vpop.f32.mrf.mxu0
  %v210 = vadd.f32 0.0, %v209
  %v211 = vpop.f32.mrf.mxu0
  %v212 = vadd.f32 0.0, %v211
  %213 = vdwg.mxu0
  %v214 = vpack.c.bf16 %v177, %v175
  %v215 = vpack.c.bf16 %v182, %v180
  %v216 = vpack.c.bf16 %v187, %v185
  %v217 = vpack.c.bf16 %v192, %v190
  %v218 = vpack.c.bf16 %v197, %v195
  %v219 = vpack.c.bf16 %v202, %v200
  %v220 = vpack.c.bf16 %v207, %v205
  %v221 = vpack.c.bf16 %v212, %v210
  %v222 = vld [vmem:[%s4] sm:$0xff]
  %v223 = vld [vmem:[%s4 + $0x8] sm:$0xff]
  %v224 = vld [vmem:[%s4 + $0x10] sm:$0xff]
  %v225 = vld [vmem:[%s4 + $0x18] sm:$0xff]
  %v226 = vld [vmem:[%s4 + $0x20] sm:$0xff]
  %v227 = vld [vmem:[%s4 + $0x28] sm:$0xff]
  %v228 = vld [vmem:[%s4 + $0x30] sm:$0xff]
  %v229 = vld [vmem:[%s4 + $0x38] sm:$0xff]
  %v230 = vld [vmem:[%s4 + $0x40] sm:$0xff]
  %v231 = vld [vmem:[%s4 + $0x48] sm:$0xff]
  %v232 = vld [vmem:[%s4 + $0x50] sm:$0xff]
  %v233 = vld [vmem:[%s4 + $0x58] sm:$0xff]
  %v234 = vld [vmem:[%s4 + $0x60] sm:$0xff]
  %v235 = vld [vmem:[%s4 + $0x68] sm:$0xff]
  %v236 = vld [vmem:[%s4 + $0x70] sm:$0xff]
  %v237 = vld [vmem:[%s4 + $0x78] sm:$0xff]
  %v238 = vld [vmem:[%s0] sm:$0xf]
  %v239 = vld [vmem:[%s0 + $0x4] sm:$0xf]
  %v240 = vld [vmem:[%s0 + $0x8] sm:$0xf]
  %v241 = vld [vmem:[%s0 + $0xc] sm:$0xf]
  %v242 = vld [vmem:[%s0 + $0x10] sm:$0xf]
  %v243 = vld [vmem:[%s0 + $0x14] sm:$0xf]
  %v244 = vld [vmem:[%s0 + $0x18] sm:$0xf]
  %v245 = vld [vmem:[%s0 + $0x1c] sm:$0xf]
  %v246 = vld [vmem:[%s0 + $0x20] sm:$0xf]
  %v247 = vld [vmem:[%s0 + $0x24] sm:$0xf]
  %v248 = vld [vmem:[%s0 + $0x28] sm:$0xf]
  %v249 = vld [vmem:[%s0 + $0x2c] sm:$0xf]
  %v250 = vld [vmem:[%s0 + $0x30] sm:$0xf]
  %v251 = vld [vmem:[%s0 + $0x34] sm:$0xf]
  %v252 = vld [vmem:[%s0 + $0x38] sm:$0xf]
  %v253 = vld [vmem:[%s0 + $0x3c] sm:$0xf]
  %v270 = vunpack.c.l.b16 %v238
  %v271 = vunpack.c.l.b16 %v239
  %v272 = vunpack.c.l.b16 %v240
  %v273 = vunpack.c.l.b16 %v241
  %v274 = vunpack.c.l.b16 %v242
  %v275 = vunpack.c.l.b16 %v243
  %v276 = vunpack.c.l.b16 %v244
  %v277 = vunpack.c.l.b16 %v245
  %v278 = vunpack.c.l.b16 %v246
  %v279 = vunpack.c.l.b16 %v247
  %v280 = vunpack.c.l.b16 %v248
  %v281 = vunpack.c.l.b16 %v249
  %v282 = vunpack.c.l.b16 %v250
  %v283 = vunpack.c.l.b16 %v251
  %v284 = vunpack.c.l.b16 %v252
  %v285 = vunpack.c.l.b16 %v253
  %v286 = vpack.c.b16 %v271, %v270
  %v287 = vpack.c.b16 %v273, %v272
  %v288 = vpack.c.b16 %v275, %v274
  %v289 = vpack.c.b16 %v277, %v276
  %v290 = vpack.c.b16 %v279, %v278
  %v291 = vpack.c.b16 %v281, %v280
  %v292 = vpack.c.b16 %v283, %v282
  %v293 = vpack.c.b16 %v285, %v284
  %302 = vmatpush.bf16.msra.mxu0 %v221
  %303 = vmatpush.bf16.msra.mxu0 %v220
  %304 = vmatpush.bf16.msra.mxu0 %v219
  %305 = vmatpush.bf16.msra.mxu0 %v218
  %306 = vmatpush.bf16.msra.mxu0 %v217
  %307 = vmatpush.bf16.msra.mxu0 %v216
  %308 = vmatpush.bf16.msra.mxu0 %v215
  %309 = vmatpush.bf16.msra.mxu0 %v214
  %310 = vmatmul.bf16.gmra.mxu0 %v286
  %v311 = vpop.f32.mrf.mxu0
  %v312 = vadd.f32 0.0, %v311
  %v313 = vpop.f32.mrf.mxu0
  %v314 = vadd.f32 0.0, %v313
  %315 = vmatmul.bf16.gmra.mxu0 %v287
  %v316 = vpop.f32.mrf.mxu0
  %v317 = vadd.f32 0.0, %v316
  %v318 = vpop.f32.mrf.mxu0
  %v319 = vadd.f32 0.0, %v318
  %320 = vmatmul.bf16.gmra.mxu0 %v288
  %v321 = vpop.f32.mrf.mxu0
  %v322 = vadd.f32 0.0, %v321
  %v323 = vpop.f32.mrf.mxu0
  %v324 = vadd.f32 0.0, %v323
  %325 = vmatmul.bf16.gmra.mxu0 %v289
  %v326 = vpop.f32.mrf.mxu0
  %v327 = vadd.f32 0.0, %v326
  %v328 = vpop.f32.mrf.mxu0
  %v329 = vadd.f32 0.0, %v328
  %330 = vmatmul.bf16.gmra.mxu0 %v290
  %v331 = vpop.f32.mrf.mxu0
  %v332 = vadd.f32 0.0, %v331
  %v333 = vpop.f32.mrf.mxu0
  %v334 = vadd.f32 0.0, %v333
  %335 = vmatmul.bf16.gmra.mxu0 %v291
  %v336 = vpop.f32.mrf.mxu0
  %v337 = vadd.f32 0.0, %v336
  %v338 = vpop.f32.mrf.mxu0
  %v339 = vadd.f32 0.0, %v338
  %340 = vmatmul.bf16.gmra.mxu0 %v292
  %v341 = vpop.f32.mrf.mxu0
  %v342 = vadd.f32 0.0, %v341
  %v343 = vpop.f32.mrf.mxu0
  %v344 = vadd.f32 0.0, %v343
  %345 = vmatmul.bf16.gmra.mxu0 %v293
  %v346 = vpop.f32.mrf.mxu0
  %v347 = vadd.f32 0.0, %v346
  %v348 = vpop.f32.mrf.mxu0
  %v349 = vadd.f32 0.0, %v348
  %350 = vdwg.mxu0
  %v351 = vadd.f32 %v222, %v312
  %v352 = vadd.f32 %v223, %v314
  %v353 = vadd.f32 %v224, %v317
  %v354 = vadd.f32 %v225, %v319
  %v355 = vadd.f32 %v226, %v322
  %v356 = vadd.f32 %v227, %v324
  %v357 = vadd.f32 %v228, %v327
  %v358 = vadd.f32 %v229, %v329
  %v359 = vadd.f32 %v230, %v332
  %v360 = vadd.f32 %v231, %v334
  %v361 = vadd.f32 %v232, %v337
  %v362 = vadd.f32 %v233, %v339
  %v363 = vadd.f32 %v234, %v342
  %v364 = vadd.f32 %v235, %v344
  %v365 = vadd.f32 %v236, %v347
  %v366 = vadd.f32 %v237, %v349
  %367 = vst [vmem:[%s4] sm:$0xff] %v351
  %368 = vst [vmem:[%s4 + $0x8] sm:$0xff] %v352
  %369 = vst [vmem:[%s4 + $0x10] sm:$0xff] %v353
  %370 = vst [vmem:[%s4 + $0x18] sm:$0xff] %v354
  %371 = vst [vmem:[%s4 + $0x20] sm:$0xff] %v355
  %372 = vst [vmem:[%s4 + $0x28] sm:$0xff] %v356
  %373 = vst [vmem:[%s4 + $0x30] sm:$0xff] %v357
  %374 = vst [vmem:[%s4 + $0x38] sm:$0xff] %v358
  %375 = vst [vmem:[%s4 + $0x40] sm:$0xff] %v359
  %376 = vst [vmem:[%s4 + $0x48] sm:$0xff] %v360
  %377 = vst [vmem:[%s4 + $0x50] sm:$0xff] %v361
  %378 = vst [vmem:[%s4 + $0x58] sm:$0xff] %v362
  %379 = vst [vmem:[%s4 + $0x60] sm:$0xff] %v363
  %380 = vst [vmem:[%s4 + $0x68] sm:$0xff] %v364
  %381 = vst [vmem:[%s4 + $0x70] sm:$0xff] %v365
  %382 = vst [vmem:[%s4 + $0x78] sm:$0xff] %v366
  // Predicated region
  $region22: #{semi_gcn_conv_pallas.1} parent=0 // pred_check
    %p383 = pneg %p17
  $region23: #{semi_gcn_conv_pallas.1} parent=0 // pred_check_branch
    %385 = sbr.rel (%p383) target = $region25
  $region24: #{semi_gcn_conv_pallas.1} parent=0 // pred_region
    %v386 = vld [vmem:[%s4] sm:$0xff]
    %v387 = vld [vmem:[%s4 + $0x8] sm:$0xff]
    %v388 = vld [vmem:[%s4 + $0x10] sm:$0xff]
    %v389 = vld [vmem:[%s4 + $0x18] sm:$0xff]
    %v390 = vld [vmem:[%s4 + $0x20] sm:$0xff]
    %v391 = vld [vmem:[%s4 + $0x28] sm:$0xff]
    %v392 = vld [vmem:[%s4 + $0x30] sm:$0xff]
    %v393 = vld [vmem:[%s4 + $0x38] sm:$0xff]
    %v394 = vld [vmem:[%s4 + $0x40] sm:$0xff]
    %v395 = vld [vmem:[%s4 + $0x48] sm:$0xff]
    %v396 = vld [vmem:[%s4 + $0x50] sm:$0xff]
    %v397 = vld [vmem:[%s4 + $0x58] sm:$0xff]
    %v398 = vld [vmem:[%s4 + $0x60] sm:$0xff]
    %v399 = vld [vmem:[%s4 + $0x68] sm:$0xff]
    %v400 = vld [vmem:[%s4 + $0x70] sm:$0xff]
    %v401 = vld [vmem:[%s4 + $0x78] sm:$0xff]
    %v402 = vld [vmem:[%s3] sm:$0x1]
    %v404 = vperm.slane %v402, 0
    %v406 = vadd.f32 %v386, %v404
    %v407 = vadd.f32 %v387, %v404
    %v408 = vadd.f32 %v388, %v404
    %v409 = vadd.f32 %v389, %v404
    %v410 = vadd.f32 %v390, %v404
    %v411 = vadd.f32 %v391, %v404
    %v412 = vadd.f32 %v392, %v404
    %v413 = vadd.f32 %v393, %v404
    %v414 = vadd.f32 %v394, %v404
    %v415 = vadd.f32 %v395, %v404
    %v416 = vadd.f32 %v396, %v404
    %v417 = vadd.f32 %v397, %v404
    %v418 = vadd.f32 %v398, %v404
    %v419 = vadd.f32 %v399, %v404
    %v420 = vadd.f32 %v400, %v404
    %v421 = vadd.f32 %v401, %v404
    %v422 = vmax.f32 %v406, 0.0
    %v423 = vmax.f32 %v407, 0.0
    %v424 = vmax.f32 %v408, 0.0
    %v425 = vmax.f32 %v409, 0.0
    %v426 = vmax.f32 %v410, 0.0
    %v427 = vmax.f32 %v411, 0.0
    %v428 = vmax.f32 %v412, 0.0
    %v429 = vmax.f32 %v413, 0.0
    %v430 = vmax.f32 %v414, 0.0
    %v431 = vmax.f32 %v415, 0.0
    %v432 = vmax.f32 %v416, 0.0
    %v433 = vmax.f32 %v417, 0.0
    %v434 = vmax.f32 %v418, 0.0
    %v435 = vmax.f32 %v419, 0.0
    %v436 = vmax.f32 %v420, 0.0
    %v437 = vmax.f32 %v421, 0.0
    %438 = vst [vmem:[%s4] sm:$0xff] %v422
    %439 = vst [vmem:[%s4 + $0x8] sm:$0xff] %v423
    %440 = vst [vmem:[%s4 + $0x10] sm:$0xff] %v424
    %441 = vst [vmem:[%s4 + $0x18] sm:$0xff] %v425
    %442 = vst [vmem:[%s4 + $0x20] sm:$0xff] %v426
    %443 = vst [vmem:[%s4 + $0x28] sm:$0xff] %v427
    %444 = vst [vmem:[%s4 + $0x30] sm:$0xff] %v428
    %445 = vst [vmem:[%s4 + $0x38] sm:$0xff] %v429
    %446 = vst [vmem:[%s4 + $0x40] sm:$0xff] %v430
    %447 = vst [vmem:[%s4 + $0x48] sm:$0xff] %v431
    %448 = vst [vmem:[%s4 + $0x50] sm:$0xff] %v432
    %449 = vst [vmem:[%s4 + $0x58] sm:$0xff] %v433
    %450 = vst [vmem:[%s4 + $0x60] sm:$0xff] %v434
    %451 = vst [vmem:[%s4 + $0x68] sm:$0xff] %v435
    %452 = vst [vmem:[%s4 + $0x70] sm:$0xff] %v436
    %453 = vst [vmem:[%s4 + $0x78] sm:$0xff] %v437
  $region25: #{semi_gcn_conv_pallas.1} parent=0 // pred_fallthru
    _
  // Predicated region
  $region26: #{semi_gcn_conv_pallas.1} parent=0 // pred_check
    _
  $region27: #{semi_gcn_conv_pallas.1} parent=0 // pred_check_branch
    %455 = sbr.rel (0) target = $region29
  $region28: #{semi_gcn_conv_pallas.1} parent=0 // pred_region
    _
  $region29: #{semi_gcn_conv_pallas.1} parent=0 // pred_fallthru
    _
  // Predicated region
  $region30: #{semi_gcn_conv_pallas.1} parent=0 // pred_check
    _
  $region31: #{semi_gcn_conv_pallas.1} parent=0 // pred_check_branch
    %457 = sbr.rel (0) target = $region33
  $region32: #{semi_gcn_conv_pallas.1} parent=0 // pred_region
    _
  $region33: #{semi_gcn_conv_pallas.1} parent=0 // pred_fallthru
    _

</llo_original>
